<compile_context>
chip_gen: v6e
topology: v6e:2x2x1
jax: 0.10.0
libtpu: 0.0.40
codegen_flags: <defaults>
</compile_context>

<pallas_src>
import jax
import jax.numpy as jnp
from jax.experimental import pallas as pl
from jax.experimental.pallas import tpu as pltpu

HIDDEN = 256          # fixed by the PyTorch module (nn.Linear(state_dim, 256) etc.)
LANE = 128            # TPU lane width
MAX_TB = 512          # batch tile cap (single step for typical RL batches)


def _round_up(x, m):
    return ((x + m - 1) // m) * m


def _actor_kernel(ma_ref, x_ref, w1_ref, b1_ref, w2_ref, b2_ref, w3_ref, b3_ref,
                  o_ref):
    # Layer 1: [TB, S](bf16) @ [S, H](bf16) -> f32 acc, bias+relu in f32 (VPU).
    x = x_ref[...].astype(jnp.bfloat16)
    h1 = jnp.dot(x, w1_ref[...], preferred_element_type=jnp.float32)
    h1 = jnp.maximum(h1 + b1_ref[...], 0.0)

    # Layer 2: [TB, H] @ [H, H]
    h2 = jnp.dot(h1.astype(jnp.bfloat16), w2_ref[...],
                 preferred_element_type=jnp.float32)
    h2 = jnp.maximum(h2 + b2_ref[...], 0.0)

    # Layer 3: [TB, H] @ [H, A_pad] -> max_action * tanh (tanh on EUP, scale on VPU)
    h3 = jnp.dot(h2.astype(jnp.bfloat16), w3_ref[...],
                 preferred_element_type=jnp.float32)
    h3 = h3 + b3_ref[...]
    o_ref[...] = (ma_ref[0] * jnp.tanh(h3)).astype(o_ref.dtype)


def actor_forward(state, params, max_action):
    """state: [B, state_dim] f32. params: dict of W1,b1,W2,b2,W3,b3 (f32).
    Returns [B, action_dim] f32 = max_action * tanh(MLP(state))."""
    B, S = state.shape
    H = params["w1"].shape[1]
    A = params["w3"].shape[1]

    # Batch tile: multiple of 8 (f32 sublane), capped at MAX_TB.
    TB = min(MAX_TB, _round_up(max(B, 8), 8))
    num_tiles = pl.cdiv(B, TB)
    B_pad = num_tiles * TB
    # Lane-dense output slab (unmasked vst; wrapper slices back to A).
    A_pad = _round_up(A, LANE)

    # Pad the batch with zero rows (sliced off afterwards).
    if B_pad != B:
        state = jnp.pad(state, ((0, B_pad - B), (0, 0)))

    # Weights -> bf16 (MXU native / half the HBM bytes); biases stay f32.
    w1 = params["w1"].astype(jnp.bfloat16)
    w2 = params["w2"].astype(jnp.bfloat16)
    w3 = params["w3"]
    b1 = params["b1"]
    b2 = params["b2"]
    b3 = params["b3"]
    if A_pad != A:
        w3 = jnp.pad(w3, ((0, 0), (0, A_pad - A)))
        b3 = jnp.pad(b3, ((0, 0), (0, A_pad - A)))
    w3 = w3.astype(jnp.bfloat16)

    ma = jnp.asarray([max_action], dtype=jnp.float32)  # SMEM scalar

    out = pl.pallas_call(
        _actor_kernel,
        out_shape=jax.ShapeDtypeStruct((B_pad, A_pad), jnp.float32),
        grid_spec=pltpu.PrefetchScalarGridSpec(
            num_scalar_prefetch=0,
            grid=(num_tiles,),
            in_specs=[
                pl.BlockSpec(memory_space=pltpu.MemorySpace.SMEM),  # max_action
                pl.BlockSpec((TB, S), lambda i: (i, 0)),            # state tile
                pl.BlockSpec((S, H), lambda i: (0, 0)),             # w1 (VMEM resident)
                pl.BlockSpec((1, H), lambda i: (0, 0)),             # b1
                pl.BlockSpec((H, H), lambda i: (0, 0)),             # w2
                pl.BlockSpec((1, H), lambda i: (0, 0)),             # b2
                pl.BlockSpec((H, A_pad), lambda i: (0, 0)),         # w3
                pl.BlockSpec((1, A_pad), lambda i: (0, 0)),         # b3
            ],
            out_specs=pl.BlockSpec((TB, A_pad), lambda i: (i, 0)),
        ),
        compiler_params=pltpu.CompilerParams(
            # batch axis is independent -> megacore sharding on v7x, harmless elsewhere
            dimension_semantics=("parallel",),
        ),
    )(ma, state, w1, b1, w2, b2, w3, b3)

    return out[:B, :A]


def init_actor_params(key, state_dim, action_dim, hidden=HIDDEN):
    """Deterministic synthetic init (uniform like PyTorch's default Linear init)."""
    ks = jax.random.split(key, 6)

    def linear(kw, kb, fan_in, fan_out):
        bound = 1.0 / jnp.sqrt(fan_in)
        w = jax.random.uniform(kw, (fan_in, fan_out), jnp.float32, -bound, bound)
        b = jax.random.uniform(kb, (1, fan_out), jnp.float32, -bound, bound)
        return w, b

    w1, b1 = linear(ks[0], ks[1], state_dim, hidden)
    w2, b2 = linear(ks[2], ks[3], hidden, hidden)
    w3, b3 = linear(ks[4], ks[5], hidden, action_dim)
    return {"w1": w1, "b1": b1, "w2": w2, "b2": b2, "w3": w3, "b3": b3}


def actor_forward_ref(state, params, max_action):
    """Pure-JAX f32 reference for correctness checking."""
    a = jnp.maximum(state @ params["w1"] + params["b1"], 0.0)
    a = jnp.maximum(a @ params["w2"] + params["b2"], 0.0)
    return max_action * jnp.tanh(a @ params["w3"] + params["b3"])


if __name__ == "__main__":
    key = jax.random.PRNGKey(0)
    k_params, k_s1, k_s2, k_s3 = jax.random.split(key, 4)

    state_dim, action_dim = 16, 8
    max_action = 1.0
    params = init_actor_params(k_params, state_dim, action_dim, hidden=HIDDEN)

    # Small batch (single tile, sublane padding 4 -> 8).
    batch = 4
    state = jax.random.normal(k_s1, (batch, state_dim), jnp.float32)
    out = jax.block_until_ready(actor_forward(state, params, max_action))
    ref = jax.block_until_ready(actor_forward_ref(state, params, max_action))
    assert out.shape == (batch, action_dim)
    assert jnp.max(jnp.abs(out - ref)) < 2e-2, "mismatch vs reference (small batch)"

    # Non-multiple-of-8 batch (single tile, batch padded to 304).
    batch2 = 300
    state2 = jax.random.normal(k_s2, (batch2, state_dim), jnp.float32)
    out2 = jax.block_until_ready(actor_forward(state2, params, max_action))
    ref2 = jax.block_until_ready(actor_forward_ref(state2, params, max_action))
    assert out2.shape == (batch2, action_dim)
    assert jnp.max(jnp.abs(out2 - ref2)) < 2e-2, "mismatch vs reference (padded batch)"

    # Batch > MAX_TB -> exercises multi-step grid with resident weights.
    batch3 = 700
    state3 = jax.random.normal(k_s3, (batch3, state_dim), jnp.float32)
    out3 = jax.block_until_ready(actor_forward(state3, params, max_action))
    ref3 = jax.block_until_ready(actor_forward_ref(state3, params, max_action))
    assert out3.shape == (batch3, action_dim)
    assert jnp.max(jnp.abs(out3 - ref3)) < 2e-2, "mismatch vs reference (tiled batch)"

    print("KERNEL_OK")
</pallas_src>

<mosaic_0001>
module attributes {stable_mosaic.version = 11 : i64} {
  func.func @_actor_kernel(%arg0: i32, %arg1: memref<1xf32, #tpu.memory_space<smem>>, %arg2: memref<8x16xf32, #tpu.memory_space<vmem>>, %arg3: memref<16x256xbf16, #tpu.memory_space<vmem>>, %arg4: memref<1x256xf32, #tpu.memory_space<vmem>>, %arg5: memref<256x256xbf16, #tpu.memory_space<vmem>>, %arg6: memref<1x256xf32, #tpu.memory_space<vmem>>, %arg7: memref<256x128xbf16, #tpu.memory_space<vmem>>, %arg8: memref<1x128xf32, #tpu.memory_space<vmem>>, %arg9: memref<8x128xf32, #tpu.memory_space<vmem>>) attributes {dimension_semantics = [#tpu.dimension_semantics<parallel>], iteration_bounds = array<i64: 1>, scalar_prefetch = 0 : i64, scratch_operands = 0 : i64, tpu.core_type = #tpu.core_type<tc>, window_params = [{transform_indices = @transform_0, window_bounds = array<i64: 1>}, {transform_indices = @transform_1, window_bounds = array<i64: 8, 16>}, {pipeline_mode = #tpu.pipeline_mode<synchronous>, transform_indices = @transform_2, window_bounds = array<i64: 16, 256>}, {pipeline_mode = #tpu.pipeline_mode<synchronous>, transform_indices = @transform_3, window_bounds = array<i64: 1, 256>}, {pipeline_mode = #tpu.pipeline_mode<synchronous>, transform_indices = @transform_4, window_bounds = array<i64: 256, 256>}, {pipeline_mode = #tpu.pipeline_mode<synchronous>, transform_indices = @transform_5, window_bounds = array<i64: 1, 256>}, {pipeline_mode = #tpu.pipeline_mode<synchronous>, transform_indices = @transform_6, window_bounds = array<i64: 256, 128>}, {pipeline_mode = #tpu.pipeline_mode<synchronous>, transform_indices = @transform_7, window_bounds = array<i64: 1, 128>}, {transform_indices = @transform_8, window_bounds = array<i64: 8, 128>}]} {
    %c0 = arith.constant 0 : index
    %c0_0 = arith.constant 0 : index
    %0 = vector.load %arg2[%c0, %c0_0] : memref<8x16xf32, #tpu.memory_space<vmem>>, vector<8x16xf32>
    %1 = arith.truncf %0 : vector<8x16xf32> to vector<8x16xbf16>
    %c0_1 = arith.constant 0 : index
    %c0_2 = arith.constant 0 : index
    %2 = vector.load %arg3[%c0_1, %c0_2] : memref<16x256xbf16, #tpu.memory_space<vmem>>, vector<16x256xbf16>
    %cst = arith.constant dense<0.000000e+00> : vector<8x256xf32>
    %3 = tpu.matmul %1, %2, %cst {dimension_numbers = #tpu.dot_dimension_numbers<[1], [0], [0], [1], [0, 0, 1, 1], [], []>} : vector<8x16xbf16>, vector<16x256xbf16>, vector<8x256xf32> -> vector<8x256xf32>
    %c0_3 = arith.constant 0 : index
    %c0_4 = arith.constant 0 : index
    %4 = vector.load %arg4[%c0_3, %c0_4] : memref<1x256xf32, #tpu.memory_space<vmem>>, vector<1x256xf32>
    %5 = vector.broadcast %4 : vector<1x256xf32> to vector<8x256xf32>
    %6 = arith.addf %3, %5 : vector<8x256xf32>
    %cst_5 = arith.constant 0.000000e+00 : f32
    %7 = vector.broadcast %cst_5 : f32 to vector<8x256xf32>
    %8 = arith.maximumf %6, %7 : vector<8x256xf32>
    %9 = arith.truncf %8 : vector<8x256xf32> to vector<8x256xbf16>
    %c0_6 = arith.constant 0 : index
    %c0_7 = arith.constant 0 : index
    %10 = vector.load %arg5[%c0_6, %c0_7] : memref<256x256xbf16, #tpu.memory_space<vmem>>, vector<256x256xbf16>
    %cst_8 = arith.constant dense<0.000000e+00> : vector<8x256xf32>
    %11 = tpu.matmul %9, %10, %cst_8 {dimension_numbers = #tpu.dot_dimension_numbers<[1], [0], [0], [1], [0, 0, 1, 1], [], []>} : vector<8x256xbf16>, vector<256x256xbf16>, vector<8x256xf32> -> vector<8x256xf32>
    %c0_9 = arith.constant 0 : index
    %c0_10 = arith.constant 0 : index
    %12 = vector.load %arg6[%c0_9, %c0_10] : memref<1x256xf32, #tpu.memory_space<vmem>>, vector<1x256xf32>
    %13 = vector.broadcast %12 : vector<1x256xf32> to vector<8x256xf32>
    %14 = arith.addf %11, %13 : vector<8x256xf32>
    %cst_11 = arith.constant 0.000000e+00 : f32
    %15 = vector.broadcast %cst_11 : f32 to vector<8x256xf32>
    %16 = arith.maximumf %14, %15 : vector<8x256xf32>
    %17 = arith.truncf %16 : vector<8x256xf32> to vector<8x256xbf16>
    %c0_12 = arith.constant 0 : index
    %c0_13 = arith.constant 0 : index
    %18 = vector.load %arg7[%c0_12, %c0_13] : memref<256x128xbf16, #tpu.memory_space<vmem>>, vector<256x128xbf16>
    %cst_14 = arith.constant dense<0.000000e+00> : vector<8x128xf32>
    %19 = tpu.matmul %17, %18, %cst_14 {dimension_numbers = #tpu.dot_dimension_numbers<[1], [0], [0], [1], [0, 0, 1, 1], [], []>} : vector<8x256xbf16>, vector<256x128xbf16>, vector<8x128xf32> -> vector<8x128xf32>
    %c0_15 = arith.constant 0 : index
    %c0_16 = arith.constant 0 : index
    %20 = vector.load %arg8[%c0_15, %c0_16] : memref<1x128xf32, #tpu.memory_space<vmem>>, vector<1x128xf32>
    %21 = vector.broadcast %20 : vector<1x128xf32> to vector<8x128xf32>
    %22 = arith.addf %19, %21 : vector<8x128xf32>
    %c0_17 = arith.constant 0 : index
    %23 = memref.load %arg1[%c0_17] : memref<1xf32, #tpu.memory_space<smem>>
    %24 = math.tanh %22 : vector<8x128xf32>
    %25 = vector.broadcast %23 : f32 to vector<8x128xf32>
    %26 = arith.mulf %25, %24 : vector<8x128xf32>
    %c0_18 = arith.constant 0 : index
    %c0_19 = arith.constant 0 : index
    %27 = vector.load %arg9[%c0_18, %c0_19] : memref<8x128xf32, #tpu.memory_space<vmem>>, vector<8x128xf32>
    tpu.vector_store %arg9[%c0_18, %c0_19], %26 {strides = array<i32>} : memref<8x128xf32, #tpu.memory_space<vmem>>, vector<8x128xf32>,
    return
  }
  func.func @transform_0(%arg0: i32) -> i32 {
    %c0_i32 = arith.constant 0 : i32
    %c0_i32_0 = arith.constant 0 : i32
    return %c0_i32 : i32
  }
  func.func @transform_1(%arg0: i32) -> (i32, i32) {
    %c0_i32 = arith.constant 0 : i32
    %c0_i32_0 = arith.constant 0 : i32
    return %arg0, %c0_i32 : i32, i32
  }
  func.func @transform_2(%arg0: i32) -> (i32, i32) {
    %c0_i32 = arith.constant 0 : i32
    %c0_i32_0 = arith.constant 0 : i32
    %c0_i32_1 = arith.constant 0 : i32
    return %c0_i32, %c0_i32_0 : i32, i32
  }
  func.func @transform_3(%arg0: i32) -> (i32, i32) {
    %c0_i32 = arith.constant 0 : i32
    %c0_i32_0 = arith.constant 0 : i32
    %c0_i32_1 = arith.constant 0 : i32
    return %c0_i32, %c0_i32_0 : i32, i32
  }
  func.func @transform_4(%arg0: i32) -> (i32, i32) {
    %c0_i32 = arith.constant 0 : i32
    %c0_i32_0 = arith.constant 0 : i32
    %c0_i32_1 = arith.constant 0 : i32
    return %c0_i32, %c0_i32_0 : i32, i32
  }
  func.func @transform_5(%arg0: i32) -> (i32, i32) {
    %c0_i32 = arith.constant 0 : i32
    %c0_i32_0 = arith.constant 0 : i32
    %c0_i32_1 = arith.constant 0 : i32
    return %c0_i32, %c0_i32_0 : i32, i32
  }
  func.func @transform_6(%arg0: i32) -> (i32, i32) {
    %c0_i32 = arith.constant 0 : i32
    %c0_i32_0 = arith.constant 0 : i32
    %c0_i32_1 = arith.constant 0 : i32
    return %c0_i32, %c0_i32_0 : i32, i32
  }
  func.func @transform_7(%arg0: i32) -> (i32, i32) {
    %c0_i32 = arith.constant 0 : i32
    %c0_i32_0 = arith.constant 0 : i32
    %c0_i32_1 = arith.constant 0 : i32
    return %c0_i32, %c0_i32_0 : i32, i32
  }
  func.func @transform_8(%arg0: i32) -> (i32, i32) {
    %c0_i32 = arith.constant 0 : i32
    %c0_i32_0 = arith.constant 0 : i32
    return %arg0, %c0_i32 : i32, i32
  }
}

</mosaic_0001>

<llo_original>
// kernel: tpu_custom_call.1
$region0: #{tpu_custom_call.1}
  #allocation0 [shape = 'u32[]', space=smem, size = 0x4, offset = 0x4, fixed_abs, tag = 'smem constant byte address 0x4 - core index']
  #allocation1 [shape = 'u32[144,128]{1,0:T(1,128)}', space=vmem, size = 0x12000, scoped, tag = 'internal scratch']
  #allocation2 [shape = 'f32[1]{0:T(128)S(6)}', space=smem, size = 0x200, scoped, tag = 'scoped memory for tpu_custom_call.1']
  %s0 = inlined_call_operand.<no memory space> [shape: f32[1], index: 0, kind: input, shape index: {}]
  %s1 = inlined_call_operand.hbm [shape: f32[8,16], index: 1, kind: input, shape index: {}]
  %s2 = inlined_call_operand.hbm [shape: bf16[16,256], index: 2, kind: input, shape index: {}]
  %s3 = inlined_call_operand.vmem [shape: f32[1,256], index: 3, kind: input, shape index: {}]
  %s4 = inlined_call_operand.hbm [shape: bf16[256,256], index: 4, kind: input, shape index: {}]
  %s5 = inlined_call_operand.vmem [shape: f32[1,256], index: 5, kind: input, shape index: {}]
  %s6 = inlined_call_operand.hbm [shape: bf16[256,128], index: 6, kind: input, shape index: {}]
  %s7 = inlined_call_operand.vmem [shape: f32[1,128], index: 7, kind: input, shape index: {}]
  %s8 = inlined_call_operand.hbm [shape: f32[8,128], index: 8, kind: output, shape index: {}]
  %s9 = sld [smem:[#allocation0]]
  $region58: #{tpu_custom_call.1} parent=0
    _
  %s11 = ssub.s32 1, %s9
  %s12 = scalar_select 0, %s11, %s9
  %13 = sst [smem:[#allocation2]] %s0
  $region1: #{tpu_custom_call.1} parent=0
    #allocation3 [shape = 'u8[4096]{0}', space=vmem, size = 0x1000, scoped, tag = 'input window, operand 1, single buffered']
    #allocation4 [shape = 's32[1]{0}', space=sflag, size = 0x4, scoped, tag = 'scoped memory for tpu_custom_call.1']
    #allocation5 [shape = 's32[1]{0}', space=sflag, size = 0x4, scoped, tag = 'scoped memory for tpu_custom_call.1']
    #allocation6 [shape = 'u8[8192]{0}', space=vmem, size = 0x2000, scoped, tag = 'input window, operand 2, single buffered']
    #allocation7 [shape = 's32[1]{0}', space=sflag, size = 0x4, scoped, tag = 'scoped memory for tpu_custom_call.1']
    #allocation8 [shape = 'u8[131072]{0}', space=vmem, size = 0x20000, scoped, tag = 'input window, operand 4, single buffered']
    #allocation9 [shape = 'u8[65536]{0}', space=vmem, size = 0x10000, scoped, tag = 'input window, operand 6, single buffered']
    #allocation10 [shape = 's32[1]{0}', space=sflag, size = 0x4, scoped, tag = 'scoped memory for tpu_custom_call.1']
    #allocation11 [shape = 'u8[4096]{0}', space=vmem, size = 0x1000, scoped, tag = 'output window, operand 0, single buffered']
    %14 = vsyncpa [#allocation4], 0
    %15 = vsyncpa [#allocation7], 0
    %16 = vsyncpa [#allocation10], 0
    %17 = vsyncpa [#allocation5], 0
    // Predicated region
    $region2: #{tpu_custom_call.1} parent=1 // pred_check
      _
    $region3: #{tpu_custom_call.1} parent=1 // pred_check_branch
      %19 = sbr.rel (0) target = $region5
    $region4: #{tpu_custom_call.1} parent=1 // pred_region
      _
    $region5: #{tpu_custom_call.1} parent=1 // pred_fallthru
      _
    // Predicated region
    $region6: #{tpu_custom_call.1} parent=1 // pred_check
      _
    $region7: #{tpu_custom_call.1} parent=1 // pred_check_branch
      %21 = sbr.rel (0) target = $region9
    $region8: #{tpu_custom_call.1} parent=1 // pred_region
      %s23 = ssub.s32 128, 128
      %24 = vsyncadd [#allocation4], %s23
      %s26 = sshll.u32 [#allocation3], 4
      %s27 = int_to_ptr.vmem [resolvable:$true] %s26
      %29 = dma.hbm_to_vmem [thread:$0]  %s1, 128, %s27, [#allocation4]
    $region9: #{tpu_custom_call.1} parent=1 // pred_fallthru
      _
    // Predicated region
    $region10: #{tpu_custom_call.1} parent=1 // pred_check
      _
    $region11: #{tpu_custom_call.1} parent=1 // pred_check_branch
      %31 = sbr.rel (0) target = $region13
    $region12: #{tpu_custom_call.1} parent=1 // pred_region
      %s33 = ssub.s32 256, 256
      %34 = vsyncadd [#allocation7], %s33
      %s35 = sshll.u32 [#allocation6], 4
      %s36 = int_to_ptr.vmem [resolvable:$true] %s35
      %41 = dma.hbm_to_vmem [thread:$0]  %s2, 256, %s36, [#allocation7], 128, 128, 8
    $region13: #{tpu_custom_call.1} parent=1 // pred_fallthru
      _
    // Predicated region
    $region14: #{tpu_custom_call.1} parent=1 // pred_check
      _
    $region15: #{tpu_custom_call.1} parent=1 // pred_check_branch
      %43 = sbr.rel (0) target = $region17
    $region16: #{tpu_custom_call.1} parent=1 // pred_region
      _
    $region17: #{tpu_custom_call.1} parent=1 // pred_fallthru
      _
    // Predicated region
    $region18: #{tpu_custom_call.1} parent=1 // pred_check
      _
    $region19: #{tpu_custom_call.1} parent=1 // pred_check_branch
      %45 = sbr.rel (0) target = $region21
    $region20: #{tpu_custom_call.1} parent=1 // pred_region
      %s47 = ssub.s32 4096, 4096
      %48 = vsyncadd [#allocation7], %s47
      %s49 = sshll.u32 [#allocation8], 4
      %s50 = int_to_ptr.vmem [resolvable:$true] %s49
      %55 = dma.hbm_to_vmem [thread:$0]  %s4, 4096, %s50, [#allocation7], 128, 128, 8
    $region21: #{tpu_custom_call.1} parent=1 // pred_fallthru
      _
    // Predicated region
    $region22: #{tpu_custom_call.1} parent=1 // pred_check
      _
    $region23: #{tpu_custom_call.1} parent=1 // pred_check_branch
      %57 = sbr.rel (0) target = $region25
    $region24: #{tpu_custom_call.1} parent=1 // pred_region
      _
    $region25: #{tpu_custom_call.1} parent=1 // pred_fallthru
      _
    // Predicated region
    $region26: #{tpu_custom_call.1} parent=1 // pred_check
      _
    $region27: #{tpu_custom_call.1} parent=1 // pred_check_branch
      %59 = sbr.rel (0) target = $region29
    $region28: #{tpu_custom_call.1} parent=1 // pred_region
      %s61 = ssub.s32 2048, 2048
      %62 = vsyncadd [#allocation10], %s61
      %s63 = sshll.u32 [#allocation9], 4
      %s64 = int_to_ptr.vmem [resolvable:$true] %s63
      %69 = dma.hbm_to_vmem [thread:$0]  %s6, 2048, %s64, [#allocation10], 64, 64, 4
    $region29: #{tpu_custom_call.1} parent=1 // pred_fallthru
      _
    // Predicated region
    $region30: #{tpu_custom_call.1} parent=1 // pred_check
      _
    $region31: #{tpu_custom_call.1} parent=1 // pred_check_branch
      %71 = sbr.rel (0) target = $region33
    $region32: #{tpu_custom_call.1} parent=1 // pred_region
      _
    $region33: #{tpu_custom_call.1} parent=1 // pred_fallthru
      _
    // Predicated region
    $region34: #{tpu_custom_call.1} parent=1 // pred_check
      _
    $region35: #{tpu_custom_call.1} parent=1 // pred_check_branch
      %73 = sbr.rel (0) target = $region37
    $region36: #{tpu_custom_call.1} parent=1 // pred_region
      %74 = dma.done [#allocation4], 128
    $region37: #{tpu_custom_call.1} parent=1 // pred_fallthru
      _
    // Predicated region
    $region38: #{tpu_custom_call.1} parent=1 // pred_check
      _
    $region39: #{tpu_custom_call.1} parent=1 // pred_check_branch
      %76 = sbr.rel (0) target = $region41
    $region40: #{tpu_custom_call.1} parent=1 // pred_region
      %77 = dma.done [#allocation7], 256
    $region41: #{tpu_custom_call.1} parent=1 // pred_fallthru
      _
    // Predicated region
    $region42: #{tpu_custom_call.1} parent=1 // pred_check
      _
    $region43: #{tpu_custom_call.1} parent=1 // pred_check_branch
      %79 = sbr.rel (0) target = $region45
    $region44: #{tpu_custom_call.1} parent=1 // pred_region
      %80 = dma.done [#allocation7], 4096
    $region45: #{tpu_custom_call.1} parent=1 // pred_fallthru
      _
    // Predicated region
    $region46: #{tpu_custom_call.1} parent=1 // pred_check
      _
    $region47: #{tpu_custom_call.1} parent=1 // pred_check_branch
      %82 = sbr.rel (0) target = $region49
    $region48: #{tpu_custom_call.1} parent=1 // pred_region
      %83 = dma.done [#allocation10], 2048
    $region49: #{tpu_custom_call.1} parent=1 // pred_fallthru
      _
    %v85 = vld [vmem:[#allocation3] sm:$0xff]
    %v86 = vpack.c.bf16 %v85, %v85
    %v87 = vld [vmem:[#allocation6] sm:$0xff]
    %v88 = vld [vmem:[#allocation6 + $0x8] sm:$0xff]
    %v89 = vld [vmem:[%s3] sm:$0x3]
    %v91 = vlaneseq
    %v92 = vshrl.u32 %v91, 7
    %v93 = vsub.s32 0, %v92
    %v94 = vrot.slane %v89, %v93
    %v95 = vlaneseq
    %v96 = vshrl.u32 %v95, 7
    %v97 = vsub.s32 1, %v96
    %v98 = vrot.slane %v89, %v97
    %v103 = vunpack.c.l.b16 %v87
    %v104 = vunpack.c.h.b16 %v87
    %v105 = vunpack.c.l.b16 %v88
    %v106 = vunpack.c.h.b16 %v88
    %v107 = vpack.c.b16 %v105, %v103
    %v108 = vpack.c.b16 %v106, %v104
    %vm111 = vcmask 130048
    %v113 = vsel %vm111, %v86, 0
    %115 = vmatprep.subr.bf16.mxu0 0
    %116 = vmatpush1.bf16.msra.mxu0 0
    %117 = vmatprep.subr.bf16.mxu0 0
    %118 = vmatpush1.bf16.msra.mxu0 0
    %119 = vmatprep.subr.bf16.mxu0 0
    %120 = vmatpush1.bf16.msra.mxu0 0
    %121 = vmatprep.subr.bf16.mxu0 0
    %122 = vmatpush1.bf16.msra.mxu0 0
    %123 = vmatprep.subr.bf16.mxu0 0
    %124 = vmatpush1.bf16.msra.mxu0 0
    %125 = vmatprep.subr.bf16.mxu0 0
    %126 = vmatpush1.bf16.msra.mxu0 0
    %127 = vmatprep.subr.bf16.mxu0 0
    %128 = vmatpush1.bf16.msra.mxu0 0
    %129 = vmatprep.subr.bf16.mxu0 %v108
    %130 = vmatpush1.bf16.msra.mxu0 %v107
    %131 = vmatprep.subr.bf16.mxu0 0
    %132 = vmatpush2.bf16.msra.mxu0 0
    %133 = vmatprep.subr.bf16.mxu0 0
    %134 = vmatpush2.bf16.msra.mxu0 0
    %135 = vmatprep.subr.bf16.mxu0 0
    %136 = vmatpush2.bf16.msra.mxu0 0
    %137 = vmatprep.subr.bf16.mxu0 0
    %138 = vmatpush2.bf16.msra.mxu0 0
    %139 = vmatprep.subr.bf16.mxu0 0
    %140 = vmatpush2.bf16.msra.mxu0 0
    %141 = vmatprep.subr.bf16.mxu0 0
    %142 = vmatpush2.bf16.msra.mxu0 0
    %143 = vmatprep.subr.bf16.mxu0 0
    %144 = vmatpush2.bf16.msra.mxu0 0
    %145 = vmatprep.subr.bf16.mxu0 0
    %146 = vmatpush2.bf16.msra.mxu0 0
    %147 = vmatprep.mubr.bf16.mxu0 0
    %148 = vmatmul.mubr.bf16.gmra.mxu0 %v113
    %v149 = vpop.f32.mrf.mxu0
    %v150 = vadd.f32 %v94, %v149
    %v151 = vpop.f32.mrf.mxu0
    %v152 = vadd.f32 %v98, %v151
    %v153 = vpop.f32.mrf.mxu0
    %v154 = vpop.f32.mrf.mxu0
    %155 = vdwg.mxu0
    %v156 = vmax.f32 %v150, 0.0
    %v157 = vmax.f32 %v152, 0.0
    %v158 = vpack.c.bf16 %v156, %v156
    %v159 = vpack.c.bf16 %v157, %v157
    %v160 = vld [vmem:[#allocation8] sm:$0xff]
    %v161 = vld [vmem:[#allocation8 + $0x8] sm:$0xff]
    %v162 = vld [vmem:[#allocation8 + $0x10] sm:$0xff]
    %v163 = vld [vmem:[#allocation8 + $0x18] sm:$0xff]
    %v164 = vld [vmem:[#allocation8 + $0x20] sm:$0xff]
    %v165 = vld [vmem:[#allocation8 + $0x28] sm:$0xff]
    %v166 = vld [vmem:[#allocation8 + $0x30] sm:$0xff]
    %v167 = vld [vmem:[#allocation8 + $0x38] sm:$0xff]
    %v168 = vld [vmem:[#allocation8 + $0x40] sm:$0xff]
    %v169 = vld [vmem:[#allocation8 + $0x48] sm:$0xff]
    %v170 = vld [vmem:[#allocation8 + $0x50] sm:$0xff]
    %v171 = vld [vmem:[#allocation8 + $0x58] sm:$0xff]
    %v172 = vld [vmem:[#allocation8 + $0x60] sm:$0xff]
    %v173 = vld [vmem:[#allocation8 + $0x68] sm:$0xff]
    %v174 = vld [vmem:[#allocation8 + $0x70] sm:$0xff]
    %v175 = vld [vmem:[#allocation8 + $0x78] sm:$0xff]
    %v176 = vld [vmem:[#allocation8 + $0x80] sm:$0xff]
    %v177 = vld [vmem:[#allocation8 + $0x88] sm:$0xff]
    %v178 = vld [vmem:[#allocation8 + $0x90] sm:$0xff]
    %v179 = vld [vmem:[#allocation8 + $0x98] sm:$0xff]
    %v180 = vld [vmem:[#allocation8 + $0xa0] sm:$0xff]
    %v181 = vld [vmem:[#allocation8 + $0xa8] sm:$0xff]
    %v182 = vld [vmem:[#allocation8 + $0xb0] sm:$0xff]
    %v183 = vld [vmem:[#allocation8 + $0xb8] sm:$0xff]
    %v184 = vld [vmem:[#allocation8 + $0xc0] sm:$0xff]
    %v185 = vld [vmem:[#allocation8 + $0xc8] sm:$0xff]
    %v186 = vld [vmem:[#allocation8 + $0xd0] sm:$0xff]
    %v187 = vld [vmem:[#allocation8 + $0xd8] sm:$0xff]
    %v188 = vld [vmem:[#allocation8 + $0xe0] sm:$0xff]
    %v189 = vld [vmem:[#allocation8 + $0xe8] sm:$0xff]
    %v190 = vld [vmem:[#allocation8 + $0xf0] sm:$0xff]
    %v191 = vld [vmem:[#allocation8 + $0xf8] sm:$0xff]
    %v192 = vld [vmem:[%s5] sm:$0x3]
    %v194 = vlaneseq
    %v195 = vshrl.u32 %v194, 7
    %v196 = vsub.s32 0, %v195
    %v197 = vrot.slane %v192, %v196
    %v198 = vlaneseq
    %v199 = vshrl.u32 %v198, 7
    %v200 = vsub.s32 1, %v199
    %v201 = vrot.slane %v192, %v200
    %v236 = vunpack.c.l.b16 %v160
    %v237 = vunpack.c.h.b16 %v160
    %v238 = vunpack.c.l.b16 %v161
    %v239 = vunpack.c.h.b16 %v161
    %v240 = vunpack.c.l.b16 %v162
    %v241 = vunpack.c.h.b16 %v162
    %v242 = vunpack.c.l.b16 %v163
    %v243 = vunpack.c.h.b16 %v163
    %v244 = vunpack.c.l.b16 %v164
    %v245 = vunpack.c.h.b16 %v164
    %v246 = vunpack.c.l.b16 %v165
    %v247 = vunpack.c.h.b16 %v165
    %v248 = vunpack.c.l.b16 %v166
    %v249 = vunpack.c.h.b16 %v166
    %v250 = vunpack.c.l.b16 %v167
    %v251 = vunpack.c.h.b16 %v167
    %v252 = vunpack.c.l.b16 %v168
    %v253 = vunpack.c.h.b16 %v168
    %v254 = vunpack.c.l.b16 %v169
    %v255 = vunpack.c.h.b16 %v169
    %v256 = vunpack.c.l.b16 %v170
    %v257 = vunpack.c.h.b16 %v170
    %v258 = vunpack.c.l.b16 %v171
    %v259 = vunpack.c.h.b16 %v171
    %v260 = vunpack.c.l.b16 %v172
    %v261 = vunpack.c.h.b16 %v172
    %v262 = vunpack.c.l.b16 %v173
    %v263 = vunpack.c.h.b16 %v173
    %v264 = vunpack.c.l.b16 %v174
    %v265 = vunpack.c.h.b16 %v174
    %v266 = vunpack.c.l.b16 %v175
    %v267 = vunpack.c.h.b16 %v175
    %v268 = vunpack.c.l.b16 %v176
    %v269 = vunpack.c.h.b16 %v176
    %v270 = vunpack.c.l.b16 %v177
    %v271 = vunpack.c.h.b16 %v177
    %v272 = vunpack.c.l.b16 %v178
    %v273 = vunpack.c.h.b16 %v178
    %v274 = vunpack.c.l.b16 %v179
    %v275 = vunpack.c.h.b16 %v179
    %v276 = vunpack.c.l.b16 %v180
    %v277 = vunpack.c.h.b16 %v180
    %v278 = vunpack.c.l.b16 %v181
    %v279 = vunpack.c.h.b16 %v181
    %v280 = vunpack.c.l.b16 %v182
    %v281 = vunpack.c.h.b16 %v182
    %v282 = vunpack.c.l.b16 %v183
    %v283 = vunpack.c.h.b16 %v183
    %v284 = vunpack.c.l.b16 %v184
    %v285 = vunpack.c.h.b16 %v184
    %v286 = vunpack.c.l.b16 %v185
    %v287 = vunpack.c.h.b16 %v185
    %v288 = vunpack.c.l.b16 %v186
    %v289 = vunpack.c.h.b16 %v186
    %v290 = vunpack.c.l.b16 %v187
    %v291 = vunpack.c.h.b16 %v187
    %v292 = vunpack.c.l.b16 %v188
    %v293 = vunpack.c.h.b16 %v188
    %v294 = vunpack.c.l.b16 %v189
    %v295 = vunpack.c.h.b16 %v189
    %v296 = vunpack.c.l.b16 %v190
    %v297 = vunpack.c.h.b16 %v190
    %v298 = vunpack.c.l.b16 %v191
    %v299 = vunpack.c.h.b16 %v191
    %v300 = vpack.c.b16 %v238, %v236
    %v301 = vpack.c.b16 %v239, %v237
    %v302 = vpack.c.b16 %v242, %v240
    %v303 = vpack.c.b16 %v243, %v241
    %v304 = vpack.c.b16 %v246, %v244
    %v305 = vpack.c.b16 %v247, %v245
    %v306 = vpack.c.b16 %v250, %v248
    %v307 = vpack.c.b16 %v251, %v249
    %v308 = vpack.c.b16 %v254, %v252
    %v309 = vpack.c.b16 %v255, %v253
    %v310 = vpack.c.b16 %v258, %v256
    %v311 = vpack.c.b16 %v259, %v257
    %v312 = vpack.c.b16 %v262, %v260
    %v313 = vpack.c.b16 %v263, %v261
    %v314 = vpack.c.b16 %v266, %v264
    %v315 = vpack.c.b16 %v267, %v265
    %v316 = vpack.c.b16 %v270, %v268
    %v317 = vpack.c.b16 %v271, %v269
    %v318 = vpack.c.b16 %v274, %v272
    %v319 = vpack.c.b16 %v275, %v273
    %v320 = vpack.c.b16 %v278, %v276
    %v321 = vpack.c.b16 %v279, %v277
    %v322 = vpack.c.b16 %v282, %v280
    %v323 = vpack.c.b16 %v283, %v281
    %v324 = vpack.c.b16 %v286, %v284
    %v325 = vpack.c.b16 %v287, %v285
    %v326 = vpack.c.b16 %v290, %v288
    %v327 = vpack.c.b16 %v291, %v289
    %v328 = vpack.c.b16 %v294, %v292
    %v329 = vpack.c.b16 %v295, %v293
    %v330 = vpack.c.b16 %v298, %v296
    %v331 = vpack.c.b16 %v299, %v297
    %364 = vmatprep.subr.bf16.mxu0 %v315
    %365 = vmatpush1.bf16.msra.mxu0 %v314
    %366 = vmatprep.subr.bf16.mxu0 %v313
    %367 = vmatpush1.bf16.msra.mxu0 %v312
    %368 = vmatprep.subr.bf16.mxu0 %v311
    %369 = vmatpush1.bf16.msra.mxu0 %v310
    %370 = vmatprep.subr.bf16.mxu0 %v309
    %371 = vmatpush1.bf16.msra.mxu0 %v308
    %372 = vmatprep.subr.bf16.mxu0 %v307
    %373 = vmatpush1.bf16.msra.mxu0 %v306
    %374 = vmatprep.subr.bf16.mxu0 %v305
    %375 = vmatpush1.bf16.msra.mxu0 %v304
    %376 = vmatprep.subr.bf16.mxu0 %v303
    %377 = vmatpush1.bf16.msra.mxu0 %v302
    %378 = vmatprep.subr.bf16.mxu0 %v301
    %379 = vmatpush1.bf16.msra.mxu0 %v300
    %380 = vmatprep.subr.bf16.mxu0 %v331
    %381 = vmatpush2.bf16.msra.mxu0 %v330
    %382 = vmatprep.subr.bf16.mxu0 %v329
    %383 = vmatpush2.bf16.msra.mxu0 %v328
    %384 = vmatprep.subr.bf16.mxu0 %v327
    %385 = vmatpush2.bf16.msra.mxu0 %v326
    %386 = vmatprep.subr.bf16.mxu0 %v325
    %387 = vmatpush2.bf16.msra.mxu0 %v324
    %388 = vmatprep.subr.bf16.mxu0 %v323
    %389 = vmatpush2.bf16.msra.mxu0 %v322
    %390 = vmatprep.subr.bf16.mxu0 %v321
    %391 = vmatpush2.bf16.msra.mxu0 %v320
    %392 = vmatprep.subr.bf16.mxu0 %v319
    %393 = vmatpush2.bf16.msra.mxu0 %v318
    %394 = vmatprep.subr.bf16.mxu0 %v317
    %395 = vmatpush2.bf16.msra.mxu0 %v316
    %396 = vmatprep.mubr.bf16.mxu0 %v159
    %397 = vmatmul.mubr.bf16.gmra.mxu0 %v158
    %v398 = vpop.f32.mrf.mxu0
    %v399 = vadd.f32 %v197, %v398
    %v400 = vpop.f32.mrf.mxu0
    %v401 = vadd.f32 %v201, %v400
    %v402 = vpop.f32.mrf.mxu0
    %v403 = vpop.f32.mrf.mxu0
    %404 = vdwg.mxu0
    %v405 = vmax.f32 %v399, 0.0
    %v406 = vmax.f32 %v401, 0.0
    %v407 = vpack.c.bf16 %v405, %v405
    %v408 = vpack.c.bf16 %v406, %v406
    %v409 = vld [vmem:[#allocation9] sm:$0xf]
    %v410 = vld [vmem:[#allocation9 + $0x4] sm:$0xf]
    %v411 = vld [vmem:[#allocation9 + $0x8] sm:$0xf]
    %v412 = vld [vmem:[#allocation9 + $0xc] sm:$0xf]
    %v413 = vld [vmem:[#allocation9 + $0x10] sm:$0xf]
    %v414 = vld [vmem:[#allocation9 + $0x14] sm:$0xf]
    %v415 = vld [vmem:[#allocation9 + $0x18] sm:$0xf]
    %v416 = vld [vmem:[#allocation9 + $0x1c] sm:$0xf]
    %v417 = vld [vmem:[#allocation9 + $0x20] sm:$0xf]
    %v418 = vld [vmem:[#allocation9 + $0x24] sm:$0xf]
    %v419 = vld [vmem:[#allocation9 + $0x28] sm:$0xf]
    %v420 = vld [vmem:[#allocation9 + $0x2c] sm:$0xf]
    %v421 = vld [vmem:[#allocation9 + $0x30] sm:$0xf]
    %v422 = vld [vmem:[#allocation9 + $0x34] sm:$0xf]
    %v423 = vld [vmem:[#allocation9 + $0x38] sm:$0xf]
    %v424 = vld [vmem:[#allocation9 + $0x3c] sm:$0xf]
    %v425 = vld [vmem:[#allocation9 + $0x40] sm:$0xf]
    %v426 = vld [vmem:[#allocation9 + $0x44] sm:$0xf]
    %v427 = vld [vmem:[#allocation9 + $0x48] sm:$0xf]
    %v428 = vld [vmem:[#allocation9 + $0x4c] sm:$0xf]
    %v429 = vld [vmem:[#allocation9 + $0x50] sm:$0xf]
    %v430 = vld [vmem:[#allocation9 + $0x54] sm:$0xf]
    %v431 = vld [vmem:[#allocation9 + $0x58] sm:$0xf]
    %v432 = vld [vmem:[#allocation9 + $0x5c] sm:$0xf]
    %v433 = vld [vmem:[#allocation9 + $0x60] sm:$0xf]
    %v434 = vld [vmem:[#allocation9 + $0x64] sm:$0xf]
    %v435 = vld [vmem:[#allocation9 + $0x68] sm:$0xf]
    %v436 = vld [vmem:[#allocation9 + $0x6c] sm:$0xf]
    %v437 = vld [vmem:[#allocation9 + $0x70] sm:$0xf]
    %v438 = vld [vmem:[#allocation9 + $0x74] sm:$0xf]
    %v439 = vld [vmem:[#allocation9 + $0x78] sm:$0xf]
    %v440 = vld [vmem:[#allocation9 + $0x7c] sm:$0xf]
    %v441 = vld [vmem:[%s7] sm:$0x1]
    %v443 = vlaneseq
    %v444 = vshrl.u32 %v443, 7
    %v445 = vsub.s32 0, %v444
    %v446 = vrot.slane %v441, %v445
    %v480 = vunpack.c.l.b16 %v409
    %v481 = vunpack.c.l.b16 %v410
    %v482 = vunpack.c.l.b16 %v411
    %v483 = vunpack.c.l.b16 %v412
    %v484 = vunpack.c.l.b16 %v413
    %v485 = vunpack.c.l.b16 %v414
    %v486 = vunpack.c.l.b16 %v415
    %v487 = vunpack.c.l.b16 %v416
    %v488 = vunpack.c.l.b16 %v417
    %v489 = vunpack.c.l.b16 %v418
    %v490 = vunpack.c.l.b16 %v419
    %v491 = vunpack.c.l.b16 %v420
    %v492 = vunpack.c.l.b16 %v421
    %v493 = vunpack.c.l.b16 %v422
    %v494 = vunpack.c.l.b16 %v423
    %v495 = vunpack.c.l.b16 %v424
    %v496 = vunpack.c.l.b16 %v425
    %v497 = vunpack.c.l.b16 %v426
    %v498 = vunpack.c.l.b16 %v427
    %v499 = vunpack.c.l.b16 %v428
    %v500 = vunpack.c.l.b16 %v429
    %v501 = vunpack.c.l.b16 %v430
    %v502 = vunpack.c.l.b16 %v431
    %v503 = vunpack.c.l.b16 %v432
    %v504 = vunpack.c.l.b16 %v433
    %v505 = vunpack.c.l.b16 %v434
    %v506 = vunpack.c.l.b16 %v435
    %v507 = vunpack.c.l.b16 %v436
    %v508 = vunpack.c.l.b16 %v437
    %v509 = vunpack.c.l.b16 %v438
    %v510 = vunpack.c.l.b16 %v439
    %v511 = vunpack.c.l.b16 %v440
    %v512 = vpack.c.b16 %v481, %v480
    %v513 = vpack.c.b16 %v483, %v482
    %v514 = vpack.c.b16 %v485, %v484
    %v515 = vpack.c.b16 %v487, %v486
    %v516 = vpack.c.b16 %v489, %v488
    %v517 = vpack.c.b16 %v491, %v490
    %v518 = vpack.c.b16 %v493, %v492
    %v519 = vpack.c.b16 %v495, %v494
    %v520 = vpack.c.b16 %v497, %v496
    %v521 = vpack.c.b16 %v499, %v498
    %v522 = vpack.c.b16 %v501, %v500
    %v523 = vpack.c.b16 %v503, %v502
    %v524 = vpack.c.b16 %v505, %v504
    %v525 = vpack.c.b16 %v507, %v506
    %v526 = vpack.c.b16 %v509, %v508
    %v527 = vpack.c.b16 %v511, %v510
    %544 = vmatprep.subr.bf16.mxu0 0
    %545 = vmatpush1.bf16.msra.mxu0 %v519
    %546 = vmatprep.subr.bf16.mxu0 0
    %547 = vmatpush1.bf16.msra.mxu0 %v518
    %548 = vmatprep.subr.bf16.mxu0 0
    %549 = vmatpush1.bf16.msra.mxu0 %v517
    %550 = vmatprep.subr.bf16.mxu0 0
    %551 = vmatpush1.bf16.msra.mxu0 %v516
    %552 = vmatprep.subr.bf16.mxu0 0
    %553 = vmatpush1.bf16.msra.mxu0 %v515
    %554 = vmatprep.subr.bf16.mxu0 0
    %555 = vmatpush1.bf16.msra.mxu0 %v514
    %556 = vmatprep.subr.bf16.mxu0 0
    %557 = vmatpush1.bf16.msra.mxu0 %v513
    %558 = vmatprep.subr.bf16.mxu0 0
    %559 = vmatpush1.bf16.msra.mxu0 %v512
    %560 = vmatprep.subr.bf16.mxu0 0
    %561 = vmatpush2.bf16.msra.mxu0 %v527
    %562 = vmatprep.subr.bf16.mxu0 0
    %563 = vmatpush2.bf16.msra.mxu0 %v526
    %564 = vmatprep.subr.bf16.mxu0 0
    %565 = vmatpush2.bf16.msra.mxu0 %v525
    %566 = vmatprep.subr.bf16.mxu0 0
    %567 = vmatpush2.bf16.msra.mxu0 %v524
    %568 = vmatprep.subr.bf16.mxu0 0
    %569 = vmatpush2.bf16.msra.mxu0 %v523
    %570 = vmatprep.subr.bf16.mxu0 0
    %571 = vmatpush2.bf16.msra.mxu0 %v522
    %572 = vmatprep.subr.bf16.mxu0 0
    %573 = vmatpush2.bf16.msra.mxu0 %v521
    %574 = vmatprep.subr.bf16.mxu0 0
    %575 = vmatpush2.bf16.msra.mxu0 %v520
    %576 = vmatprep.mubr.bf16.mxu0 %v408
    %577 = vmatmul.mubr.bf16.gmra.mxu0 %v407
    %v578 = vpop.f32.mrf.mxu0
    %v579 = vadd.f32 %v446, %v578
    %v580 = vpop.f32.mrf.mxu0
    %v581 = vpop.f32.mrf.mxu0
    %v582 = vpop.f32.mrf.mxu0
    %583 = vdwg.mxu0
    %s584 = sld [smem:[#allocation2]]
    %v585 = vtanh.pop %v579
    %v586 = vstv %s584
    %v587 = vmul.f32 %v586, %v585
    %588 = vst [vmem:[#allocation11] sm:$0xff] %v587
    // Predicated region
    $region50: #{tpu_custom_call.1} parent=1 // pred_check
      _
    $region51: #{tpu_custom_call.1} parent=1 // pred_check_branch
      %590 = sbr.rel (0) target = $region53
    $region52: #{tpu_custom_call.1} parent=1 // pred_region
      %s592 = ssub.s32 128, 128
      %593 = vsyncadd [#allocation5], %s592
      %s595 = sshll.u32 [#allocation11], 4
      %s596 = int_to_ptr.vmem [resolvable:$true] %s595
      %598 = dma.vmem_to_hbm [thread:$0]  %s596, 128, %s8, [#allocation5]
    $region53: #{tpu_custom_call.1} parent=1 // pred_fallthru
      _
    // Predicated region
    $region54: #{tpu_custom_call.1} parent=1 // pred_check
      _
    $region55: #{tpu_custom_call.1} parent=1 // pred_check_branch
      %600 = sbr.rel (0) target = $region57
    $region56: #{tpu_custom_call.1} parent=1 // pred_region
      %601 = dma.done [#allocation5], 128
    $region57: #{tpu_custom_call.1} parent=1 // pred_fallthru
      _
    %602 = vsyncpa [#allocation4], 1
    %603 = vsyncpa [#allocation7], 1
    %604 = vsyncpa [#allocation10], 1
    %605 = vsyncpa [#allocation5], 1

</llo_original>
